<compile_context>
chip_gen: v7x
topology: tpu7x:2x2x1
jax: 0.10.0
libtpu: 0.0.40
codegen_flags: <defaults>
</compile_context>

<pallas_src>
import numpy as np
import jax
import jax.numpy as jnp
from jax.experimental import pallas as pl
from jax.experimental.pallas import tpu as pltpu


def _cdiv(a, b):
    return -(-a // b)


def _pool_matrix(length, k):
    """AvgPool1d(k, stride=k, ceil_mode=True) as an (Lout, L) matrix.

    Partial windows divide by the actual overlap; matches PyTorch exactly for
    divisible sizes (as used here).
    """
    lout = _cdiv(length, k)
    m = np.zeros((lout, length), np.float32)
    for p in range(lout):
        s = p * k
        e = min(s + k, length)
        m[p, s:e] = 1.0 / (e - s)
    return m


def _upsample_matrix(l_out, l_in):
    """1-D bilinear interpolation, align_corners=True, as an (Lout, Lin) matrix."""
    m = np.zeros((l_out, l_in), np.float32)
    if l_in == 1:
        m[:, 0] = 1.0
        return m
    if l_out == 1:
        m[0, 0] = 1.0
        return m
    for p in range(l_out):
        src = p * (l_in - 1) / (l_out - 1)
        i0 = min(int(np.floor(src)), l_in - 1)
        i1 = min(i0 + 1, l_in - 1)
        frac = src - i0
        m[p, i0] += 1.0 - frac
        m[p, i1] += frac
    return m


def _halo(m):
    """Prepend/append a zero row: the conv's vertical zero padding comes free."""
    z = np.zeros((1, m.shape[1]), np.float32)
    return np.concatenate([z, m, z], axis=0)


def _conv_lane_mats_stacked(weight_oihw, w, c, scale):
    """3x3 conv (padding=1) + folded BN scale on the (rows=h, lanes=(c,w)) layout.

    Returns the three kernel-row banded matrices pre-stacked on the K axis as
    one (3*C*w, C*w) matrix, so the conv is a single matmul against the
    lane-concat of the three vertically shifted halo slices.
    """
    wt = np.asarray(weight_oihw, np.float32)      # (O, I, 3, 3)
    sc = np.asarray(scale, np.float32)            # (O,)
    mats = np.zeros((3, c * w, c * w), np.float32)
    qs = np.arange(w)
    for kh in range(3):
        for kw in range(3):
            dq = kw - 1
            valid = (qs + dq >= 0) & (qs + dq < w)
            qv = qs[valid]
            jv = qv + dq
            for co in range(c):
                for ci in range(c):
                    mats[kh, ci * w + jv, co * w + qv] += wt[co, ci, kh, kw] * sc[co]
    return mats.reshape(3 * c * w, c * w)


def _make_kernel(C, H, W, h1, w1, h2, w2, npi, compute_dtype):
    cw1, cw2 = C * w1, C * w2

    def kernel(x_ref,
               pwd_ref,                 # (C*W, cw1+cw2)  fused width pool
               ph1_ref, ph2_ref,        # (h+2, H)        halo'd height pools
               k1_ref, k2_ref,          # (3*cw, cw)      stacked conv(+BN scale)
               b1_ref, b2_ref,          # (1, cw) f32     folded BN biases
               uh1_ref, uh2_ref,        # (H, h)          height upsamples
               uwd_ref,                 # (cw1+cw2, C*W)  fused width upsample
               o_ref):

        def branch(pwb, h, ph_ref, k_ref, b_ref, uh_ref):
            # height pool; zero halo rows built into ph -> (h+2, C*w)
            tp = jnp.dot(ph_ref[...], pwb.astype(compute_dtype),
                         preferred_element_type=jnp.float32)
            tpc = tp.astype(compute_dtype)
            # 3x3 conv + folded BN scale as ONE (h, 3*C*w) @ (3*C*w, C*w) matmul
            tcat = jnp.concatenate(
                [tpc[0:h, :], tpc[1:h + 1, :], tpc[2:h + 2, :]], axis=1)
            y = jnp.dot(tcat, k_ref[...], preferred_element_type=jnp.float32)
            y = jnp.maximum(y + b_ref[...], 0.0)      # f32 bias + ReLU
            # bilinear height upsample (left matmul) -> (H, C*w), f32
            return jnp.dot(uh_ref[...], y.astype(compute_dtype),
                           preferred_element_type=jnp.float32)

        for i in range(npi):                          # static; npi is tiny
            xs = x_ref[i]                             # (H, C*W) f32 residual
            xb = xs.astype(compute_dtype)
            # fused width pool for BOTH branches: (H, C*W) @ (C*W, cw1+cw2)
            pw = jnp.dot(xb, pwd_ref[...], preferred_element_type=jnp.float32)
            yh1 = branch(pw[:, :cw1], h1, ph1_ref, k1_ref, b1_ref, uh1_ref)
            yh2 = branch(pw[:, cw1:], h2, ph2_ref, k2_ref, b2_ref, uh2_ref)
            # fused width upsample + branch sum: one matmul, residual added once
            ycat = jnp.concatenate([yh1, yh2], axis=1).astype(compute_dtype)
            up = jnp.dot(ycat, uwd_ref[...], preferred_element_type=jnp.float32)
            o_ref[i] = (xs + up).astype(o_ref.dtype)

    return kernel


def multi_scale_block_pallas(x_nchw, params, eps=1e-5,
                             compute_dtype=jnp.bfloat16, images_per_step=1):
    N, C, H, W = x_nchw.shape
    assert N % images_per_step == 0
    h1, w1 = _cdiv(H, 2), _cdiv(W, 2)
    h2, w2 = _cdiv(H, 4), _cdiv(W, 4)
    CW = C * W

    def fold_bn(gamma, beta, mean, var):
        g = np.asarray(gamma, np.float32)
        b = np.asarray(beta, np.float32)
        m = np.asarray(mean, np.float32)
        v = np.asarray(var, np.float32)
        scale = g / np.sqrt(v + eps)
        return scale, b - m * scale

    s1, bias1 = fold_bn(params["g1"], params["be1"], params["m1"], params["v1"])
    s2, bias2 = fold_bn(params["g2"], params["be2"], params["m2"], params["v2"])

    eye_c = np.eye(C, dtype=np.float32)
    # Fused, per-channel block-diagonal width pool: (C*W, C*w1 + C*w2).
    pwd = np.concatenate([np.kron(eye_c, _pool_matrix(W, 2).T),
                          np.kron(eye_c, _pool_matrix(W, 4).T)], axis=1)
    # Fused width upsample + branch sum: (C*w1 + C*w2, C*W).
    uwd = np.concatenate([np.kron(eye_c, _upsample_matrix(W, w1).T),
                          np.kron(eye_c, _upsample_matrix(W, w2).T)], axis=0)
    ph1 = _halo(_pool_matrix(H, 2))        # (h1+2, H)
    ph2 = _halo(_pool_matrix(H, 4))        # (h2+2, H)
    uh1 = _upsample_matrix(H, h1)          # (H, h1)
    uh2 = _upsample_matrix(H, h2)          # (H, h2)
    k1 = _conv_lane_mats_stacked(params["w1"], w1, C, s1)   # (3*C*w1, C*w1)
    k2 = _conv_lane_mats_stacked(params["w2"], w2, C, s2)   # (3*C*w2, C*w2)
    b1 = np.repeat(bias1, w1).reshape(1, C * w1)
    b2 = np.repeat(bias2, w2).reshape(1, C * w2)

    mm = lambda a: jnp.asarray(a, compute_dtype)       # matmul operands
    f32 = lambda a: jnp.asarray(a, jnp.float32)        # bias stays f32
    operands = [mm(pwd), mm(ph1), mm(ph2), mm(k1), mm(k2),
                f32(b1), f32(b2), mm(uh1), mm(uh2), mm(uwd)]

    # Lane-dense slab: rows = H, lanes = (channel, width) = C*W.
    x3 = jnp.transpose(x_nchw, (0, 2, 1, 3)).reshape(N, H, CW)

    npi = images_per_step
    kernel = _make_kernel(C, H, W, h1, w1, h2, w2, npi, compute_dtype)

    # Constants are a few KB each; double-buffering them is immaterial here
    # (pl.Buffered(1) would halve their footprint once C grows).
    out3 = pl.pallas_call(
        kernel,
        out_shape=jax.ShapeDtypeStruct((N, H, CW), x_nchw.dtype),
        grid=(N // npi,),
        in_specs=[pl.BlockSpec((npi, H, CW), lambda n: (n, 0, 0))]
                 + [pl.BlockSpec(a.shape, lambda n: (0, 0)) for a in operands],
        out_specs=pl.BlockSpec((npi, H, CW), lambda n: (n, 0, 0)),
        compiler_params=pltpu.CompilerParams(
            dimension_semantics=("parallel",),
            vmem_limit_bytes=32 * 1024 * 1024),
    )(x3, *operands)

    return out3.reshape(N, H, C, W).transpose(0, 2, 1, 3)


def multi_scale_block_reference(x_nchw, params, eps=1e-5):
    """Pure-JAX NCHW reference used only to validate the Pallas kernel."""
    N, C, H, W = x_nchw.shape

    def branch(x, k, w_oihw, gamma, beta, mean, var):
        h, w = _cdiv(H, k), _cdiv(W, k)
        ph = jnp.asarray(_pool_matrix(H, k))
        pw = jnp.asarray(_pool_matrix(W, k))
        pooled = jnp.einsum('ph,qw,nchw->ncpq', ph, pw, x)
        y = jax.lax.conv_general_dilated(
            pooled, jnp.asarray(w_oihw), window_strides=(1, 1),
            padding=((1, 1), (1, 1)),
            dimension_numbers=('NCHW', 'OIHW', 'NCHW'))
        scale = gamma / jnp.sqrt(var + eps)
        bias = beta - mean * scale
        y = jnp.maximum(y * scale[None, :, None, None]
                        + bias[None, :, None, None], 0.0)
        uh = jnp.asarray(_upsample_matrix(H, h))
        uw = jnp.asarray(_upsample_matrix(W, w))
        return jnp.einsum('ph,qw,nchw->ncpq', uh, uw, y)

    x1 = branch(x_nchw, 2, params["w1"], params["g1"], params["be1"],
                params["m1"], params["v1"])
    x2 = branch(x_nchw, 4, params["w2"], params["g2"], params["be2"],
                params["m2"], params["v2"])
    return x_nchw + x1 + x2


if __name__ == "__main__":
    # C*W = 128 -> lane-dense blocks.
    N, C, H, W = 2, 8, 16, 16
    key = jax.random.PRNGKey(0)
    keys = jax.random.split(key, 11)

    x_nchw = jax.random.normal(keys[0], (N, C, H, W), jnp.float32)

    params = {
        # Conv2d(C, C, 3, 1, padding=1, bias=False) weights, torch (O, I, kh, kw)
        "w1": 0.1 * jax.random.normal(keys[1], (C, C, 3, 3), jnp.float32),
        "w2": 0.1 * jax.random.normal(keys[2], (C, C, 3, 3), jnp.float32),
        # BatchNorm2d(C) params + running stats (eval mode)
        "g1": 1.0 + 0.1 * jax.random.normal(keys[3], (C,), jnp.float32),
        "be1": 0.1 * jax.random.normal(keys[4], (C,), jnp.float32),
        "m1": 0.1 * jax.random.normal(keys[5], (C,), jnp.float32),
        "v1": 1.0 + 0.1 * jax.random.uniform(keys[6], (C,), jnp.float32),
        "g2": 1.0 + 0.1 * jax.random.normal(keys[7], (C,), jnp.float32),
        "be2": 0.1 * jax.random.normal(keys[8], (C,), jnp.float32),
        "m2": 0.1 * jax.random.normal(keys[9], (C,), jnp.float32),
        "v2": 1.0 + 0.1 * jax.random.uniform(keys[10], (C,), jnp.float32),
    }

    ref = jax.block_until_ready(multi_scale_block_reference(x_nchw, params))

    # Float32 compute path: tight tolerance.
    out_f32 = jax.block_until_ready(
        multi_scale_block_pallas(x_nchw, params, compute_dtype=jnp.float32))
    assert out_f32.shape == (N, C, H, W)
    np.testing.assert_allclose(np.asarray(out_f32), np.asarray(ref),
                               rtol=2e-3, atol=2e-3)

    # Default bf16 matmul operands, grid=(N,) "parallel" (v7x: one image per TC).
    out_bf16 = jax.block_until_ready(multi_scale_block_pallas(x_nchw, params))
    assert out_bf16.shape == (N, C, H, W)
    np.testing.assert_allclose(np.asarray(out_bf16), np.asarray(ref),
                               rtol=5e-2, atol=5e-2)

    # Collapsed grid (whole batch in one invocation) for single-TC v5e/v6e.
    out_one = jax.block_until_ready(
        multi_scale_block_pallas(x_nchw, params, images_per_step=N))
    np.testing.assert_allclose(np.asarray(out_one), np.asarray(ref),
                               rtol=5e-2, atol=5e-2)

    print("KERNEL_OK")
</pallas_src>

<mosaic_0001>
module attributes {stable_mosaic.version = 11 : i64} {
  func.func @kernel(%arg0: i32, %arg1: memref<1x16x128xf32, #tpu.memory_space<vmem>>, %arg2: memref<128x96xf32, #tpu.memory_space<vmem>>, %arg3: memref<10x16xf32, #tpu.memory_space<vmem>>, %arg4: memref<6x16xf32, #tpu.memory_space<vmem>>, %arg5: memref<192x64xf32, #tpu.memory_space<vmem>>, %arg6: memref<96x32xf32, #tpu.memory_space<vmem>>, %arg7: memref<1x64xf32, #tpu.memory_space<vmem>>, %arg8: memref<1x32xf32, #tpu.memory_space<vmem>>, %arg9: memref<16x8xf32, #tpu.memory_space<vmem>>, %arg10: memref<16x4xf32, #tpu.memory_space<vmem>>, %arg11: memref<96x128xf32, #tpu.memory_space<vmem>>, %arg12: memref<1x16x128xf32, #tpu.memory_space<vmem>>) attributes {dimension_semantics = [#tpu.dimension_semantics<parallel>], iteration_bounds = array<i64: 2>, scalar_prefetch = 0 : i64, scratch_operands = 0 : i64, tpu.core_type = #tpu.core_type<tc>, window_params = [{transform_indices = @transform_0, window_bounds = array<i64: 1, 16, 128>}, {pipeline_mode = #tpu.pipeline_mode<synchronous>, transform_indices = @transform_1, window_bounds = array<i64: 128, 96>}, {pipeline_mode = #tpu.pipeline_mode<synchronous>, transform_indices = @transform_2, window_bounds = array<i64: 10, 16>}, {pipeline_mode = #tpu.pipeline_mode<synchronous>, transform_indices = @transform_3, window_bounds = array<i64: 6, 16>}, {pipeline_mode = #tpu.pipeline_mode<synchronous>, transform_indices = @transform_4, window_bounds = array<i64: 192, 64>}, {pipeline_mode = #tpu.pipeline_mode<synchronous>, transform_indices = @transform_5, window_bounds = array<i64: 96, 32>}, {pipeline_mode = #tpu.pipeline_mode<synchronous>, transform_indices = @transform_6, window_bounds = array<i64: 1, 64>}, {pipeline_mode = #tpu.pipeline_mode<synchronous>, transform_indices = @transform_7, window_bounds = array<i64: 1, 32>}, {pipeline_mode = #tpu.pipeline_mode<synchronous>, transform_indices = @transform_8, window_bounds = array<i64: 16, 8>}, {pipeline_mode = #tpu.pipeline_mode<synchronous>, transform_indices = @transform_9, window_bounds = array<i64: 16, 4>}, {pipeline_mode = #tpu.pipeline_mode<synchronous>, transform_indices = @transform_10, window_bounds = array<i64: 96, 128>}, {transform_indices = @transform_11, window_bounds = array<i64: 1, 16, 128>}]} {
    %c0 = arith.constant 0 : index
    %c0_0 = arith.constant 0 : index
    %c0_1 = arith.constant 0 : index
    %0 = vector.load %arg1[%c0, %c0_0, %c0_1] : memref<1x16x128xf32, #tpu.memory_space<vmem>>, vector<1x16x128xf32>
    %1 = vector.shape_cast %0 : vector<1x16x128xf32> to vector<16x128xf32>
    %c0_2 = arith.constant 0 : index
    %c0_3 = arith.constant 0 : index
    %2 = vector.load %arg2[%c0_2, %c0_3] : memref<128x96xf32, #tpu.memory_space<vmem>>, vector<128x96xf32>
    %cst = arith.constant dense<0.000000e+00> : vector<16x96xf32>
    %3 = tpu.matmul %1, %2, %cst {dimension_numbers = #tpu.dot_dimension_numbers<[1], [0], [0], [1], [0, 0, 1, 1], [], []>} : vector<16x128xf32>, vector<128x96xf32>, vector<16x96xf32> -> vector<16x96xf32>
    %4 = vector.extract_strided_slice %3 {offsets = [0, 0], sizes = [16, 64], strides = [1, 1]} : vector<16x96xf32> to vector<16x64xf32>
    %c0_4 = arith.constant 0 : index
    %c0_5 = arith.constant 0 : index
    %5 = vector.load %arg3[%c0_4, %c0_5] : memref<10x16xf32, #tpu.memory_space<vmem>>, vector<10x16xf32>
    %cst_6 = arith.constant dense<0.000000e+00> : vector<10x64xf32>
    %6 = tpu.matmul %5, %4, %cst_6 {dimension_numbers = #tpu.dot_dimension_numbers<[1], [0], [0], [1], [0, 0, 1, 1], [], []>} : vector<10x16xf32>, vector<16x64xf32>, vector<10x64xf32> -> vector<10x64xf32>
    %7 = vector.extract_strided_slice %6 {offsets = [0, 0], sizes = [8, 64], strides = [1, 1]} : vector<10x64xf32> to vector<8x64xf32>
    %8 = vector.extract_strided_slice %6 {offsets = [1, 0], sizes = [8, 64], strides = [1, 1]} : vector<10x64xf32> to vector<8x64xf32>
    %9 = vector.extract_strided_slice %6 {offsets = [2, 0], sizes = [8, 64], strides = [1, 1]} : vector<10x64xf32> to vector<8x64xf32>
    %10 = tpu.concatenate %7, %8, %9 in 1 : vector<8x64xf32>, vector<8x64xf32>, vector<8x64xf32> -> vector<8x192xf32>
    %c0_7 = arith.constant 0 : index
    %c0_8 = arith.constant 0 : index
    %11 = vector.load %arg5[%c0_7, %c0_8] : memref<192x64xf32, #tpu.memory_space<vmem>>, vector<192x64xf32>
    %cst_9 = arith.constant dense<0.000000e+00> : vector<8x64xf32>
    %12 = tpu.matmul %10, %11, %cst_9 {dimension_numbers = #tpu.dot_dimension_numbers<[1], [0], [0], [1], [0, 0, 1, 1], [], []>} : vector<8x192xf32>, vector<192x64xf32>, vector<8x64xf32> -> vector<8x64xf32>
    %c0_10 = arith.constant 0 : index
    %c0_11 = arith.constant 0 : index
    %13 = vector.load %arg7[%c0_10, %c0_11] : memref<1x64xf32, #tpu.memory_space<vmem>>, vector<1x64xf32>
    %14 = vector.broadcast %13 : vector<1x64xf32> to vector<8x64xf32>
    %15 = arith.addf %12, %14 : vector<8x64xf32>
    %cst_12 = arith.constant 0.000000e+00 : f32
    %16 = vector.broadcast %cst_12 : f32 to vector<8x64xf32>
    %17 = arith.maximumf %15, %16 : vector<8x64xf32>
    %c0_13 = arith.constant 0 : index
    %c0_14 = arith.constant 0 : index
    %18 = vector.load %arg9[%c0_13, %c0_14] : memref<16x8xf32, #tpu.memory_space<vmem>>, vector<16x8xf32>
    %cst_15 = arith.constant dense<0.000000e+00> : vector<16x64xf32>
    %19 = tpu.matmul %18, %17, %cst_15 {dimension_numbers = #tpu.dot_dimension_numbers<[1], [0], [0], [1], [0, 0, 1, 1], [], []>} : vector<16x8xf32>, vector<8x64xf32>, vector<16x64xf32> -> vector<16x64xf32>
    %20 = vector.extract_strided_slice %3 {offsets = [0, 64], sizes = [16, 32], strides = [1, 1]} : vector<16x96xf32> to vector<16x32xf32>
    %c0_16 = arith.constant 0 : index
    %c0_17 = arith.constant 0 : index
    %21 = vector.load %arg4[%c0_16, %c0_17] : memref<6x16xf32, #tpu.memory_space<vmem>>, vector<6x16xf32>
    %cst_18 = arith.constant dense<0.000000e+00> : vector<6x32xf32>
    %22 = tpu.matmul %21, %20, %cst_18 {dimension_numbers = #tpu.dot_dimension_numbers<[1], [0], [0], [1], [0, 0, 1, 1], [], []>} : vector<6x16xf32>, vector<16x32xf32>, vector<6x32xf32> -> vector<6x32xf32>
    %23 = vector.extract_strided_slice %22 {offsets = [0, 0], sizes = [4, 32], strides = [1, 1]} : vector<6x32xf32> to vector<4x32xf32>
    %24 = vector.extract_strided_slice %22 {offsets = [1, 0], sizes = [4, 32], strides = [1, 1]} : vector<6x32xf32> to vector<4x32xf32>
    %25 = vector.extract_strided_slice %22 {offsets = [2, 0], sizes = [4, 32], strides = [1, 1]} : vector<6x32xf32> to vector<4x32xf32>
    %26 = tpu.concatenate %23, %24, %25 in 1 : vector<4x32xf32>, vector<4x32xf32>, vector<4x32xf32> -> vector<4x96xf32>
    %c0_19 = arith.constant 0 : index
    %c0_20 = arith.constant 0 : index
    %27 = vector.load %arg6[%c0_19, %c0_20] : memref<96x32xf32, #tpu.memory_space<vmem>>, vector<96x32xf32>
    %cst_21 = arith.constant dense<0.000000e+00> : vector<4x32xf32>
    %28 = tpu.matmul %26, %27, %cst_21 {dimension_numbers = #tpu.dot_dimension_numbers<[1], [0], [0], [1], [0, 0, 1, 1], [], []>} : vector<4x96xf32>, vector<96x32xf32>, vector<4x32xf32> -> vector<4x32xf32>
    %c0_22 = arith.constant 0 : index
    %c0_23 = arith.constant 0 : index
    %29 = vector.load %arg8[%c0_22, %c0_23] : memref<1x32xf32, #tpu.memory_space<vmem>>, vector<1x32xf32>
    %30 = vector.broadcast %29 : vector<1x32xf32> to vector<4x32xf32>
    %31 = arith.addf %28, %30 : vector<4x32xf32>
    %cst_24 = arith.constant 0.000000e+00 : f32
    %32 = vector.broadcast %cst_24 : f32 to vector<4x32xf32>
    %33 = arith.maximumf %31, %32 : vector<4x32xf32>
    %c0_25 = arith.constant 0 : index
    %c0_26 = arith.constant 0 : index
    %34 = vector.load %arg10[%c0_25, %c0_26] : memref<16x4xf32, #tpu.memory_space<vmem>>, vector<16x4xf32>
    %cst_27 = arith.constant dense<0.000000e+00> : vector<16x32xf32>
    %35 = tpu.matmul %34, %33, %cst_27 {dimension_numbers = #tpu.dot_dimension_numbers<[1], [0], [0], [1], [0, 0, 1, 1], [], []>} : vector<16x4xf32>, vector<4x32xf32>, vector<16x32xf32> -> vector<16x32xf32>
    %36 = tpu.concatenate %19, %35 in 1 : vector<16x64xf32>, vector<16x32xf32> -> vector<16x96xf32>
    %c0_28 = arith.constant 0 : index
    %c0_29 = arith.constant 0 : index
    %37 = vector.load %arg11[%c0_28, %c0_29] : memref<96x128xf32, #tpu.memory_space<vmem>>, vector<96x128xf32>
    %cst_30 = arith.constant dense<0.000000e+00> : vector<16x128xf32>
    %38 = tpu.matmul %36, %37, %cst_30 {dimension_numbers = #tpu.dot_dimension_numbers<[1], [0], [0], [1], [0, 0, 1, 1], [], []>} : vector<16x96xf32>, vector<96x128xf32>, vector<16x128xf32> -> vector<16x128xf32>
    %39 = arith.addf %1, %38 : vector<16x128xf32>
    %c0_31 = arith.constant 0 : index
    %c0_32 = arith.constant 0 : index
    %c0_33 = arith.constant 0 : index
    %40 = vector.load %arg12[%c0_31, %c0_32, %c0_33] : memref<1x16x128xf32, #tpu.memory_space<vmem>>, vector<1x16x128xf32>
    %41 = vector.shape_cast %40 : vector<1x16x128xf32> to vector<16x128xf32>
    %42 = vector.shape_cast %39 : vector<16x128xf32> to vector<1x16x128xf32>
    tpu.vector_store %arg12[%c0_31, %c0_32, %c0_33], %42 {strides = array<i32>} : memref<1x16x128xf32, #tpu.memory_space<vmem>>, vector<1x16x128xf32>,
    return
  }
  func.func @transform_0(%arg0: i32) -> (i32, i32, i32) {
    %c0_i32 = arith.constant 0 : i32
    %c0_i32_0 = arith.constant 0 : i32
    %c0_i32_1 = arith.constant 0 : i32
    return %arg0, %c0_i32, %c0_i32_0 : i32, i32, i32
  }
  func.func @transform_1(%arg0: i32) -> (i32, i32) {
    %c0_i32 = arith.constant 0 : i32
    %c0_i32_0 = arith.constant 0 : i32
    %c0_i32_1 = arith.constant 0 : i32
    return %c0_i32, %c0_i32_0 : i32, i32
  }
  func.func @transform_2(%arg0: i32) -> (i32, i32) {
    %c0_i32 = arith.constant 0 : i32
    %c0_i32_0 = arith.constant 0 : i32
    %c0_i32_1 = arith.constant 0 : i32
    return %c0_i32, %c0_i32_0 : i32, i32
  }
  func.func @transform_3(%arg0: i32) -> (i32, i32) {
    %c0_i32 = arith.constant 0 : i32
    %c0_i32_0 = arith.constant 0 : i32
    %c0_i32_1 = arith.constant 0 : i32
    return %c0_i32, %c0_i32_0 : i32, i32
  }
  func.func @transform_4(%arg0: i32) -> (i32, i32) {
    %c0_i32 = arith.constant 0 : i32
    %c0_i32_0 = arith.constant 0 : i32
    %c0_i32_1 = arith.constant 0 : i32
    return %c0_i32, %c0_i32_0 : i32, i32
  }
  func.func @transform_5(%arg0: i32) -> (i32, i32) {
    %c0_i32 = arith.constant 0 : i32
    %c0_i32_0 = arith.constant 0 : i32
    %c0_i32_1 = arith.constant 0 : i32
    return %c0_i32, %c0_i32_0 : i32, i32
  }
  func.func @transform_6(%arg0: i32) -> (i32, i32) {
    %c0_i32 = arith.constant 0 : i32
    %c0_i32_0 = arith.constant 0 : i32
    %c0_i32_1 = arith.constant 0 : i32
    return %c0_i32, %c0_i32_0 : i32, i32
  }
  func.func @transform_7(%arg0: i32) -> (i32, i32) {
    %c0_i32 = arith.constant 0 : i32
    %c0_i32_0 = arith.constant 0 : i32
    %c0_i32_1 = arith.constant 0 : i32
    return %c0_i32, %c0_i32_0 : i32, i32
  }
  func.func @transform_8(%arg0: i32) -> (i32, i32) {
    %c0_i32 = arith.constant 0 : i32
    %c0_i32_0 = arith.constant 0 : i32
    %c0_i32_1 = arith.constant 0 : i32
    return %c0_i32, %c0_i32_0 : i32, i32
  }
  func.func @transform_9(%arg0: i32) -> (i32, i32) {
    %c0_i32 = arith.constant 0 : i32
    %c0_i32_0 = arith.constant 0 : i32
    %c0_i32_1 = arith.constant 0 : i32
    return %c0_i32, %c0_i32_0 : i32, i32
  }
  func.func @transform_10(%arg0: i32) -> (i32, i32) {
    %c0_i32 = arith.constant 0 : i32
    %c0_i32_0 = arith.constant 0 : i32
    %c0_i32_1 = arith.constant 0 : i32
    return %c0_i32, %c0_i32_0 : i32, i32
  }
  func.func @transform_11(%arg0: i32) -> (i32, i32, i32) {
    %c0_i32 = arith.constant 0 : i32
    %c0_i32_0 = arith.constant 0 : i32
    %c0_i32_1 = arith.constant 0 : i32
    return %arg0, %c0_i32, %c0_i32_0 : i32, i32, i32
  }
}

</mosaic_0001>

<llo_original>
// kernel: tpu_custom_call.1
$region0: #{tpu_custom_call.1}
  #allocation0 [shape = 'u32[]', space=smem, size = 0x4, offset = 0x4, fixed_abs, tag = 'smem constant byte address 0x4 - core index']
  #allocation1 [shape = 'u32[144,128]{1,0:T(1,128)}', space=vmem, size = 0x12000, scoped, tag = 'internal scratch']
  %s0 = inlined_call_operand.vmem [shape: f32[2,16,128], index: 0, kind: input, shape index: {}]
  %s1 = inlined_call_operand.vmem [shape: f32[128,96], index: 1, kind: input, shape index: {}]
  %s2 = inlined_call_operand.vmem [shape: f32[10,16], index: 2, kind: input, shape index: {}]
  %s3 = inlined_call_operand.vmem [shape: f32[6,16], index: 3, kind: input, shape index: {}]
  %s4 = inlined_call_operand.vmem [shape: f32[192,64], index: 4, kind: input, shape index: {}]
  %s5 = inlined_call_operand.vmem [shape: f32[96,32], index: 5, kind: input, shape index: {}]
  %s6 = inlined_call_operand.vmem [shape: f32[1,64], index: 6, kind: input, shape index: {}]
  %s7 = inlined_call_operand.vmem [shape: f32[1,32], index: 7, kind: input, shape index: {}]
  %s8 = inlined_call_operand.vmem [shape: f32[16,8], index: 8, kind: input, shape index: {}]
  %s9 = inlined_call_operand.vmem [shape: f32[16,4], index: 9, kind: input, shape index: {}]
  %s10 = inlined_call_operand.vmem [shape: f32[96,128], index: 10, kind: input, shape index: {}]
  %s11 = inlined_call_operand.hbm [shape: f32[2,16,128], index: 11, kind: output, shape index: {}]
  %s12 = sld [smem:[#allocation0]]
  $region77: #{tpu_custom_call.1} parent=0
    _
  %s14 = ssub.s32 1, %s12
  %s15 = scalar_select 0, %s14, %s12
  $region1: #{tpu_custom_call.1} parent=0
    #allocation2 [shape = 'u8[16384]{0}', space=vmem, size = 0x4000, scoped, tag = 'output window, operand 0']
    #allocation3 [shape = 's32[2]{0}', space=sflag, size = 0x8, scoped, tag = 'scoped memory for tpu_custom_call.1']
    %16 = vsyncpa [#allocation3], 0
    %s17 = scalar_lea.sflag [#allocation3], 1
    %18 = vsyncpa %s17, 0
    loop: start=0, step=1, limit=4
    $region2: #{tpu_custom_call.1} parent=1 // loop_pre_header
      _
    $region3: #{tpu_custom_call.1} parent=1 // loop_header
      %s20 = sphi 0, %s24
      %p21 = scmp.ge.s32.totalorder %s20, 4
      %s30 = sphi 0, %s32
      %s33 = sphi 0, %s30
      %s34 = sphi 0, %s33
      %s50 = sphi 0, %s34
      %s54 = sphi 0, %s54
      %s56 = sphi 0, %s54
      %s57 = sphi 0, %s56
      %s71 = sphi 0, %s57
      %s75 = sphi 0, %s75
      %s77 = sphi 0, %s75
      %s78 = sphi 0, %s77
      %s92 = sphi 0, %s78
      %s96 = sphi 0, %s96
      %s98 = sphi 0, %s96
      %s99 = sphi 0, %s98
      %s113 = sphi 0, %s99
      %s117 = sphi 0, %s117
      %s119 = sphi 0, %s117
      %s120 = sphi 0, %s119
      %s134 = sphi 0, %s120
      %s138 = sphi 0, %s138
      %s140 = sphi 0, %s138
      %s141 = sphi 0, %s140
      %s155 = sphi 0, %s141
      %s159 = sphi 0, %s159
      %s161 = sphi 0, %s159
      %s162 = sphi 0, %s161
      %s176 = sphi 0, %s162
      %s180 = sphi 0, %s180
      %s182 = sphi 0, %s180
      %s183 = sphi 0, %s182
      %s197 = sphi 0, %s183
      %s201 = sphi 0, %s201
      %s203 = sphi 0, %s201
      %s204 = sphi 0, %s203
      %s218 = sphi 0, %s204
      %s222 = sphi 0, %s222
      %s224 = sphi 0, %s222
      %s225 = sphi 0, %s224
      %s239 = sphi 0, %s225
      %s243 = sphi 0, %s243
      %s245 = sphi 0, %s243
      %s246 = sphi 0, %s245
      %s260 = sphi 0, %s246
      %s266 = sphi 0, %s268
      %s269 = sphi 0, %s266
      %s270 = sphi 0, %s269
      %s286 = sphi 0, %s270
    $region4: #{tpu_custom_call.1} parent=1 // loop_header_branch
      %23 = sbr.rel (%p21) target = $region8
    $region5: #{tpu_custom_call.1} parent=1 // loop_body
      %s25 = ssub.s32 %s20, 1
      %s26 = ssub.s32 %s20, 2
      %s27 = sadd.s32 %s20, 1
      %s28 = ssub.s32 %s20, %s27
      %p29 = scmp.eq.s32.totalorder %s28, 0
      %s31 = sadd.s32 %s30, 1
      %s32 = scalar_select %p29, %s30, %s31
      %p35 = pneg %p29
      %p36 = scmp.eq.s32.totalorder %s20, 1
      %p37 = por %p35, %p36
      %p38 = scmp.ne.s32.totalorder %s30, %s33
      %p39 = scmp.eq.s32.totalorder %s20, 0
      %p40 = por %p38, %p39
      %p41 = scmp.ne.s32.totalorder %s30, %s33
      %p42 = scmp.eq.s32.totalorder %s25, 1
      %p43 = por %p41, %p42
      %p44 = scmp.ne.s32.totalorder %s33, %s34
      %p45 = scmp.eq.s32.totalorder %s25, 0
      %p46 = por %p44, %p45
      %p47 = scmp.ne.s32.totalorder %s33, %s34
      %p48 = scmp.eq.s32.totalorder %s26, 1
      %p49 = por %p47, %p48
      %p51 = scmp.ne.s32.totalorder %s34, %s50
      %p52 = scmp.eq.s32.totalorder %s26, 0
      %p53 = por %p51, %p52
      %s55 = sadd.s32 %s54, 1
      %p58 = scmp.eq.s32.totalorder %s20, 1
      %p59 = scmp.ne.s32.totalorder %s54, %s56
      %p60 = scmp.eq.s32.totalorder %s20, 0
      %p61 = por %p59, %p60
      %p62 = scmp.ne.s32.totalorder %s54, %s56
      %p63 = scmp.eq.s32.totalorder %s25, 1
      %p64 = por %p62, %p63
      %p65 = scmp.ne.s32.totalorder %s56, %s57
      %p66 = scmp.eq.s32.totalorder %s25, 0
      %p67 = por %p65, %p66
      %p68 = scmp.ne.s32.totalorder %s56, %s57
      %p69 = scmp.eq.s32.totalorder %s26, 1
      %p70 = por %p68, %p69
      %p72 = scmp.ne.s32.totalorder %s57, %s71
      %p73 = scmp.eq.s32.totalorder %s26, 0
      %p74 = por %p72, %p73
      %s76 = sadd.s32 %s75, 1
      %p79 = scmp.eq.s32.totalorder %s20, 1
      %p80 = scmp.ne.s32.totalorder %s75, %s77
      %p81 = scmp.eq.s32.totalorder %s20, 0
      %p82 = por %p80, %p81
      %p83 = scmp.ne.s32.totalorder %s75, %s77
      %p84 = scmp.eq.s32.totalorder %s25, 1
      %p85 = por %p83, %p84
      %p86 = scmp.ne.s32.totalorder %s77, %s78
      %p87 = scmp.eq.s32.totalorder %s25, 0
      %p88 = por %p86, %p87
      %p89 = scmp.ne.s32.totalorder %s77, %s78
      %p90 = scmp.eq.s32.totalorder %s26, 1
      %p91 = por %p89, %p90
      %p93 = scmp.ne.s32.totalorder %s78, %s92
      %p94 = scmp.eq.s32.totalorder %s26, 0
      %p95 = por %p93, %p94
      %s97 = sadd.s32 %s96, 1
      %p100 = scmp.eq.s32.totalorder %s20, 1
      %p101 = scmp.ne.s32.totalorder %s96, %s98
      %p102 = scmp.eq.s32.totalorder %s20, 0
      %p103 = por %p101, %p102
      %p104 = scmp.ne.s32.totalorder %s96, %s98
      %p105 = scmp.eq.s32.totalorder %s25, 1
      %p106 = por %p104, %p105
      %p107 = scmp.ne.s32.totalorder %s98, %s99
      %p108 = scmp.eq.s32.totalorder %s25, 0
      %p109 = por %p107, %p108
      %p110 = scmp.ne.s32.totalorder %s98, %s99
      %p111 = scmp.eq.s32.totalorder %s26, 1
      %p112 = por %p110, %p111
      %p114 = scmp.ne.s32.totalorder %s99, %s113
      %p115 = scmp.eq.s32.totalorder %s26, 0
      %p116 = por %p114, %p115
      %s118 = sadd.s32 %s117, 1
      %p121 = scmp.eq.s32.totalorder %s20, 1
      %p122 = scmp.ne.s32.totalorder %s117, %s119
      %p123 = scmp.eq.s32.totalorder %s20, 0
      %p124 = por %p122, %p123
      %p125 = scmp.ne.s32.totalorder %s117, %s119
      %p126 = scmp.eq.s32.totalorder %s25, 1
      %p127 = por %p125, %p126
      %p128 = scmp.ne.s32.totalorder %s119, %s120
      %p129 = scmp.eq.s32.totalorder %s25, 0
      %p130 = por %p128, %p129
      %p131 = scmp.ne.s32.totalorder %s119, %s120
      %p132 = scmp.eq.s32.totalorder %s26, 1
      %p133 = por %p131, %p132
      %p135 = scmp.ne.s32.totalorder %s120, %s134
      %p136 = scmp.eq.s32.totalorder %s26, 0
      %p137 = por %p135, %p136
      %s139 = sadd.s32 %s138, 1
      %p142 = scmp.eq.s32.totalorder %s20, 1
      %p143 = scmp.ne.s32.totalorder %s138, %s140
      %p144 = scmp.eq.s32.totalorder %s20, 0
      %p145 = por %p143, %p144
      %p146 = scmp.ne.s32.totalorder %s138, %s140
      %p147 = scmp.eq.s32.totalorder %s25, 1
      %p148 = por %p146, %p147
      %p149 = scmp.ne.s32.totalorder %s140, %s141
      %p150 = scmp.eq.s32.totalorder %s25, 0
      %p151 = por %p149, %p150
      %p152 = scmp.ne.s32.totalorder %s140, %s141
      %p153 = scmp.eq.s32.totalorder %s26, 1
      %p154 = por %p152, %p153
      %p156 = scmp.ne.s32.totalorder %s141, %s155
      %p157 = scmp.eq.s32.totalorder %s26, 0
      %p158 = por %p156, %p157
      %s160 = sadd.s32 %s159, 1
      %p163 = scmp.eq.s32.totalorder %s20, 1
      %p164 = scmp.ne.s32.totalorder %s159, %s161
      %p165 = scmp.eq.s32.totalorder %s20, 0
      %p166 = por %p164, %p165
      %p167 = scmp.ne.s32.totalorder %s159, %s161
      %p168 = scmp.eq.s32.totalorder %s25, 1
      %p169 = por %p167, %p168
      %p170 = scmp.ne.s32.totalorder %s161, %s162
      %p171 = scmp.eq.s32.totalorder %s25, 0
      %p172 = por %p170, %p171
      %p173 = scmp.ne.s32.totalorder %s161, %s162
      %p174 = scmp.eq.s32.totalorder %s26, 1
      %p175 = por %p173, %p174
      %p177 = scmp.ne.s32.totalorder %s162, %s176
      %p178 = scmp.eq.s32.totalorder %s26, 0
      %p179 = por %p177, %p178
      %s181 = sadd.s32 %s180, 1
      %p184 = scmp.eq.s32.totalorder %s20, 1
      %p185 = scmp.ne.s32.totalorder %s180, %s182
      %p186 = scmp.eq.s32.totalorder %s20, 0
      %p187 = por %p185, %p186
      %p188 = scmp.ne.s32.totalorder %s180, %s182
      %p189 = scmp.eq.s32.totalorder %s25, 1
      %p190 = por %p188, %p189
      %p191 = scmp.ne.s32.totalorder %s182, %s183
      %p192 = scmp.eq.s32.totalorder %s25, 0
      %p193 = por %p191, %p192
      %p194 = scmp.ne.s32.totalorder %s182, %s183
      %p195 = scmp.eq.s32.totalorder %s26, 1
      %p196 = por %p194, %p195
      %p198 = scmp.ne.s32.totalorder %s183, %s197
      %p199 = scmp.eq.s32.totalorder %s26, 0
      %p200 = por %p198, %p199
      %s202 = sadd.s32 %s201, 1
      %p205 = scmp.eq.s32.totalorder %s20, 1
      %p206 = scmp.ne.s32.totalorder %s201, %s203
      %p207 = scmp.eq.s32.totalorder %s20, 0
      %p208 = por %p206, %p207
      %p209 = scmp.ne.s32.totalorder %s201, %s203
      %p210 = scmp.eq.s32.totalorder %s25, 1
      %p211 = por %p209, %p210
      %p212 = scmp.ne.s32.totalorder %s203, %s204
      %p213 = scmp.eq.s32.totalorder %s25, 0
      %p214 = por %p212, %p213
      %p215 = scmp.ne.s32.totalorder %s203, %s204
      %p216 = scmp.eq.s32.totalorder %s26, 1
      %p217 = por %p215, %p216
      %p219 = scmp.ne.s32.totalorder %s204, %s218
      %p220 = scmp.eq.s32.totalorder %s26, 0
      %p221 = por %p219, %p220
      %s223 = sadd.s32 %s222, 1
      %p226 = scmp.eq.s32.totalorder %s20, 1
      %p227 = scmp.ne.s32.totalorder %s222, %s224
      %p228 = scmp.eq.s32.totalorder %s20, 0
      %p229 = por %p227, %p228
      %p230 = scmp.ne.s32.totalorder %s222, %s224
      %p231 = scmp.eq.s32.totalorder %s25, 1
      %p232 = por %p230, %p231
      %p233 = scmp.ne.s32.totalorder %s224, %s225
      %p234 = scmp.eq.s32.totalorder %s25, 0
      %p235 = por %p233, %p234
      %p236 = scmp.ne.s32.totalorder %s224, %s225
      %p237 = scmp.eq.s32.totalorder %s26, 1
      %p238 = por %p236, %p237
      %p240 = scmp.ne.s32.totalorder %s225, %s239
      %p241 = scmp.eq.s32.totalorder %s26, 0
      %p242 = por %p240, %p241
      %s244 = sadd.s32 %s243, 1
      %p247 = scmp.eq.s32.totalorder %s20, 1
      %p248 = scmp.ne.s32.totalorder %s243, %s245
      %p249 = scmp.eq.s32.totalorder %s20, 0
      %p250 = por %p248, %p249
      %p251 = scmp.ne.s32.totalorder %s243, %s245
      %p252 = scmp.eq.s32.totalorder %s25, 1
      %p253 = por %p251, %p252
      %p254 = scmp.ne.s32.totalorder %s245, %s246
      %p255 = scmp.eq.s32.totalorder %s25, 0
      %p256 = por %p254, %p255
      %p257 = scmp.ne.s32.totalorder %s245, %s246
      %p258 = scmp.eq.s32.totalorder %s26, 1
      %p259 = por %p257, %p258
      %p261 = scmp.ne.s32.totalorder %s246, %s260
      %p262 = scmp.eq.s32.totalorder %s26, 0
      %p263 = por %p261, %p262
      %s264 = ssub.s32 %s20, %s27
      %p265 = scmp.eq.s32.totalorder %s264, 0
      %s267 = sadd.s32 %s266, 1
      %s268 = scalar_select %p265, %s266, %s267
      %p271 = pneg %p265
      %p272 = scmp.eq.s32.totalorder %s20, 1
      %p273 = por %p271, %p272
      %p274 = scmp.ne.s32.totalorder %s266, %s269
      %p275 = scmp.eq.s32.totalorder %s20, 0
      %p276 = por %p274, %p275
      %p277 = scmp.ne.s32.totalorder %s266, %s269
      %p278 = scmp.eq.s32.totalorder %s25, 1
      %p279 = por %p277, %p278
      %p280 = scmp.ne.s32.totalorder %s269, %s270
      %p281 = scmp.eq.s32.totalorder %s25, 0
      %p282 = por %p280, %p281
      %p283 = scmp.ne.s32.totalorder %s269, %s270
      %p284 = scmp.eq.s32.totalorder %s26, 1
      %p285 = por %p283, %p284
      %p287 = scmp.ne.s32.totalorder %s270, %s286
      %p288 = scmp.eq.s32.totalorder %s26, 0
      %p289 = por %p287, %p288
      %p290 = scmp.le.s32.totalorder 1, %s20
      %p291 = scmp.lt.s32.totalorder %s20, 3
      %p292 = pnand %p290, %p291
      %p293 = pneg %p292
      // Predicated region
      $region9: #{tpu_custom_call.1} parent=5 // pred_check
        _
      $region10: #{tpu_custom_call.1} parent=5 // pred_check_branch
        %295 = sbr.rel (%p292) target = $region12
      $region11: #{tpu_custom_call.1} parent=5 // pred_region
        %s296 = ssub.s32 %s20, 1
        // Predicated region
        $region13: #{tpu_custom_call.1} parent=11 // pred_check
          %p297 = pneg %p67
        $region14: #{tpu_custom_call.1} parent=11 // pred_check_branch
          %299 = sbr.rel (%p297) target = $region16
        $region15: #{tpu_custom_call.1} parent=11 // pred_region
          _
        $region16: #{tpu_custom_call.1} parent=11 // pred_fallthru
          _
        // Predicated region
        $region17: #{tpu_custom_call.1} parent=11 // pred_check
          %p300 = pneg %p88
        $region18: #{tpu_custom_call.1} parent=11 // pred_check_branch
          %302 = sbr.rel (%p300) target = $region20
        $region19: #{tpu_custom_call.1} parent=11 // pred_region
          _
        $region20: #{tpu_custom_call.1} parent=11 // pred_fallthru
          _
        // Predicated region
        $region21: #{tpu_custom_call.1} parent=11 // pred_check
          %p303 = pneg %p109
        $region22: #{tpu_custom_call.1} parent=11 // pred_check_branch
          %305 = sbr.rel (%p303) target = $region24
        $region23: #{tpu_custom_call.1} parent=11 // pred_region
          _
        $region24: #{tpu_custom_call.1} parent=11 // pred_fallthru
          _
        // Predicated region
        $region25: #{tpu_custom_call.1} parent=11 // pred_check
          %p306 = pneg %p130
        $region26: #{tpu_custom_call.1} parent=11 // pred_check_branch
          %308 = sbr.rel (%p306) target = $region28
        $region27: #{tpu_custom_call.1} parent=11 // pred_region
          _
        $region28: #{tpu_custom_call.1} parent=11 // pred_fallthru
          _
        // Predicated region
        $region29: #{tpu_custom_call.1} parent=11 // pred_check
          %p309 = pneg %p151
        $region30: #{tpu_custom_call.1} parent=11 // pred_check_branch
          %311 = sbr.rel (%p309) target = $region32
        $region31: #{tpu_custom_call.1} parent=11 // pred_region
          _
        $region32: #{tpu_custom_call.1} parent=11 // pred_fallthru
          _
        // Predicated region
        $region33: #{tpu_custom_call.1} parent=11 // pred_check
          %p312 = pneg %p172
        $region34: #{tpu_custom_call.1} parent=11 // pred_check_branch
          %314 = sbr.rel (%p312) target = $region36
        $region35: #{tpu_custom_call.1} parent=11 // pred_region
          _
        $region36: #{tpu_custom_call.1} parent=11 // pred_fallthru
          _
        // Predicated region
        $region37: #{tpu_custom_call.1} parent=11 // pred_check
          %p315 = pneg %p193
        $region38: #{tpu_custom_call.1} parent=11 // pred_check_branch
          %317 = sbr.rel (%p315) target = $region40
        $region39: #{tpu_custom_call.1} parent=11 // pred_region
          _
        $region40: #{tpu_custom_call.1} parent=11 // pred_fallthru
          _
        // Predicated region
        $region41: #{tpu_custom_call.1} parent=11 // pred_check
          %p318 = pneg %p214
        $region42: #{tpu_custom_call.1} parent=11 // pred_check_branch
          %320 = sbr.rel (%p318) target = $region44
        $region43: #{tpu_custom_call.1} parent=11 // pred_region
          _
        $region44: #{tpu_custom_call.1} parent=11 // pred_fallthru
          _
        // Predicated region
        $region45: #{tpu_custom_call.1} parent=11 // pred_check
          %p321 = pneg %p235
        $region46: #{tpu_custom_call.1} parent=11 // pred_check_branch
          %323 = sbr.rel (%p321) target = $region48
        $region47: #{tpu_custom_call.1} parent=11 // pred_region
          _
        $region48: #{tpu_custom_call.1} parent=11 // pred_fallthru
          _
        // Predicated region
        $region49: #{tpu_custom_call.1} parent=11 // pred_check
          %p324 = pneg %p256
        $region50: #{tpu_custom_call.1} parent=11 // pred_check_branch
          %326 = sbr.rel (%p324) target = $region52
        $region51: #{tpu_custom_call.1} parent=11 // pred_region
          _
        $region52: #{tpu_custom_call.1} parent=11 // pred_fallthru
          _
      $region12: #{tpu_custom_call.1} parent=5 // pred_fallthru
        _
      %p327 = scmp.lt.s32.totalorder %s20, 2
      // Predicated region
      $region53: #{tpu_custom_call.1} parent=5 // pred_check
        %p328 = pneg %p327
      $region54: #{tpu_custom_call.1} parent=5 // pred_check_branch
        %330 = sbr.rel (%p328) target = $region56
      $region55: #{tpu_custom_call.1} parent=5 // pred_region
        // Predicated region
        $region57: #{tpu_custom_call.1} parent=55 // pred_check
          %p331 = pneg %p40
        $region58: #{tpu_custom_call.1} parent=55 // pred_check_branch
          %333 = sbr.rel (%p331) target = $region60
        $region59: #{tpu_custom_call.1} parent=55 // pred_region
          %p334 = scmp.lt.s32.totalorder %s20, 1
          %s335 = scalar_select %p334, %s20, 1
          %s336 = smul.addr %s335, 2
          %s337 = smul.addr %s336, 8
          %s338 = scalar_lea.vmem %s0, %s337
        $region60: #{tpu_custom_call.1} parent=55 // pred_fallthru
          _
      $region56: #{tpu_custom_call.1} parent=5 // pred_fallthru
        _
      %p339 = scmp.le.s32.totalorder 1, %s20
      %p340 = scmp.lt.s32.totalorder %s20, 3
      %p341 = pnand %p339, %p340
      %p342 = pneg %p341
      // Predicated region
      $region61: #{tpu_custom_call.1} parent=5 // pred_check
        _
      $region62: #{tpu_custom_call.1} parent=5 // pred_check_branch
        %344 = sbr.rel (%p341) target = $region64
      $region63: #{tpu_custom_call.1} parent=5 // pred_region
        %s345 = ssub.s32 %s20, 1
        %p346 = scmp.lt.s32.totalorder %s25, 1
        %s347 = scalar_select %p346, %s25, 1
        %s348 = smul.addr %s347, 2
        %s349 = smul.addr %s348, 8
        %s350 = scalar_lea.vmem %s0, %s349
        %p351 = pneg %p46
        %p352 = pneg %p43
        %p353 = pneg %p67
        %p354 = pneg %p64
        %p355 = pneg %p88
        %p356 = pneg %p85
        %p357 = pneg %p109
        %p358 = pneg %p106
        %p359 = pneg %p130
        %p360 = pneg %p127
        %p361 = pneg %p151
        %p362 = pneg %p148
        %p363 = pneg %p172
        %p364 = pneg %p169
        %p365 = pneg %p193
        %p366 = pneg %p190
        %p367 = pneg %p214
        %p368 = pneg %p211
        %p369 = pneg %p235
        %p370 = pneg %p232
        %p371 = pneg %p256
        %p372 = pneg %p253
        %p373 = pneg %p282
        %p374 = pneg %p279
        %s375 = sand.u32 %s269, 1
        %s376 = scalar_lea.sflag [#allocation3], %s375
        %s377 = sand.u32 %s269, 1
        %s378 = smul.addr %s377, 16
        %s379 = scalar_lea.vmem [#allocation2], %s378
        %p380 = scmp.lt.s32.totalorder %s25, 1
        %s381 = scalar_select %p380, %s25, 1
        %s382 = smul.addr %s381, 2
        %s383 = smul.addr %s382, 8
        %s384 = scalar_lea.vmem %s0, %s383
        %v385 = vld [vmem:[%s384] sm:$0xff]
        %v386 = vld [vmem:[%s384 + $0x8] sm:$0xff]
        %v387 = vld [vmem:[%s1] sm:$0xff]
        %v388 = vld [vmem:[%s1 + $0x8] sm:$0xff]
        %v389 = vld [vmem:[%s1 + $0x10] sm:$0xff]
        %v390 = vld [vmem:[%s1 + $0x18] sm:$0xff]
        %v391 = vld [vmem:[%s1 + $0x20] sm:$0xff]
        %v392 = vld [vmem:[%s1 + $0x28] sm:$0xff]
        %v393 = vld [vmem:[%s1 + $0x30] sm:$0xff]
        %v394 = vld [vmem:[%s1 + $0x38] sm:$0xff]
        %v395 = vld [vmem:[%s1 + $0x40] sm:$0xff]
        %v396 = vld [vmem:[%s1 + $0x48] sm:$0xff]
        %v397 = vld [vmem:[%s1 + $0x50] sm:$0xff]
        %v398 = vld [vmem:[%s1 + $0x58] sm:$0xff]
        %v399 = vld [vmem:[%s1 + $0x60] sm:$0xff]
        %v400 = vld [vmem:[%s1 + $0x68] sm:$0xff]
        %v401 = vld [vmem:[%s1 + $0x70] sm:$0xff]
        %v402 = vld [vmem:[%s1 + $0x78] sm:$0xff]
        %403 = vmatprep.subr.mxu0 0.0
        %404 = vmatpush1.msra.mxu0 %v387
        %405 = vmatprep.subr.mxu0 0.0
        %406 = vmatpush1.msra.mxu0 %v388
        %407 = vmatprep.subr.mxu0 0.0
        %408 = vmatpush1.msra.mxu0 %v389
        %409 = vmatprep.subr.mxu0 0.0
        %410 = vmatpush1.msra.mxu0 %v390
        %411 = vmatprep.subr.mxu0 0.0
        %412 = vmatpush1.msra.mxu0 %v391
        %413 = vmatprep.subr.mxu0 0.0
        %414 = vmatpush1.msra.mxu0 %v392
        %415 = vmatprep.subr.mxu0 0.0
        %416 = vmatpush1.msra.mxu0 %v393
        %417 = vmatprep.subr.mxu0 0.0
        %418 = vmatpush1.msra.mxu0 %v394
        %419 = vmatprep.subr.mxu0 0.0
        %420 = vmatpush1.msra.mxu0 %v395
        %421 = vmatprep.subr.mxu0 0.0
        %422 = vmatpush1.msra.mxu0 %v396
        %423 = vmatprep.subr.mxu0 0.0
        %424 = vmatpush1.msra.mxu0 %v397
        %425 = vmatprep.subr.mxu0 0.0
        %426 = vmatpush1.msra.mxu0 %v398
        %427 = vmatprep.subr.mxu0 0.0
        %428 = vmatpush1.msra.mxu0 %v399
        %429 = vmatprep.subr.mxu0 0.0
        %430 = vmatpush1.msra.mxu0 %v400
        %431 = vmatprep.subr.mxu0 0.0
        %432 = vmatpush1.msra.mxu0 %v401
        %433 = vmatprep.subr.mxu0 0.0
        %434 = vmatpush1.msra.mxu0 %v402
        %435 = vmatprep.subr.mxu0 0.0
        %436 = vmatpush1.msra.mxu0 0.0
        %437 = vmatprep.subr.mxu0 0.0
        %438 = vmatpush1.msra.mxu0 0.0
        %439 = vmatprep.subr.mxu0 0.0
        %440 = vmatpush1.msra.mxu0 0.0
        %441 = vmatprep.subr.mxu0 0.0
        %442 = vmatpush1.msra.mxu0 0.0
        %443 = vmatprep.subr.mxu0 0.0
        %444 = vmatpush1.msra.mxu0 0.0
        %445 = vmatprep.subr.mxu0 0.0
        %446 = vmatpush1.msra.mxu0 0.0
        %447 = vmatprep.subr.mxu0 0.0
        %448 = vmatpush1.msra.mxu0 0.0
        %449 = vmatprep.subr.mxu0 0.0
        %450 = vmatpush1.msra.mxu0 0.0
        %451 = vmatprep.subr.mxu0 0.0
        %452 = vmatpush1.msra.mxu0 0.0
        %453 = vmatprep.subr.mxu0 0.0
        %454 = vmatpush1.msra.mxu0 0.0
        %455 = vmatprep.subr.mxu0 0.0
        %456 = vmatpush1.msra.mxu0 0.0
        %457 = vmatprep.subr.mxu0 0.0
        %458 = vmatpush1.msra.mxu0 0.0
        %459 = vmatprep.subr.mxu0 0.0
        %460 = vmatpush1.msra.mxu0 0.0
        %461 = vmatprep.subr.mxu0 0.0
        %462 = vmatpush1.msra.mxu0 0.0
        %463 = vmatprep.subr.mxu0 0.0
        %464 = vmatpush1.msra.mxu0 0.0
        %465 = vmatprep.subr.mxu0 0.0
        %466 = vmatpush1.msra.mxu0 0.0
        %467 = vmatprep.mubr.f32.mxu0 0.0
        %468 = vmatmul.mubr.f32.gmra.mrb[0].mxu0 %v385
        %v469 = vpop.f32.mrb[0].mxu0
        %v470 = vadd.f32 0.0, %v469
        %v471 = vpop.f32.mrb[0].mxu0
        %472 = vmatprep.mubr.f32.mxu0 0.0
        %473 = vmatmul.mubr.f32.gmra.mrb[0].mxu0 %v386
        %v474 = vpop.f32.mrb[0].mxu0
        %v475 = vadd.f32 0.0, %v474
        %v476 = vpop.f32.mrb[0].mxu0
        %477 = vdwg.mxu0
        %v478 = vld [vmem:[%s2] sm:$0xff]
        %v479 = vld [vmem:[%s2 + $0x8] sm:$0x3]
        %vm480 = vcmask 130048
        %v482 = vsel %vm480, %v478, 0
        %v485 = vsel %vm480, %v479, 0
        %487 = vmatprep.subr.mxu0 0.0
        %488 = vmatpush1.msra.mxu0 %v470
        %489 = vmatprep.subr.mxu0 0.0
        %490 = vmatpush1.msra.mxu0 %v475
        %491 = vmatprep.subr.mxu0 0.0
        %492 = vmatpush1.msra.mxu0 0.0
        %493 = vmatprep.subr.mxu0 0.0
        %494 = vmatpush1.msra.mxu0 0.0
        %495 = vmatprep.subr.mxu0 0.0
        %496 = vmatpush1.msra.mxu0 0.0
        %497 = vmatprep.subr.mxu0 0.0
        %498 = vmatpush1.msra.mxu0 0.0
        %499 = vmatprep.subr.mxu0 0.0
        %500 = vmatpush1.msra.mxu0 0.0
        %501 = vmatprep.subr.mxu0 0.0
        %502 = vmatpush1.msra.mxu0 0.0
        %503 = vmatprep.subr.mxu0 0.0
        %504 = vmatpush1.msra.mxu0 0.0
        %505 = vmatprep.subr.mxu0 0.0
        %506 = vmatpush1.msra.mxu0 0.0
        %507 = vmatprep.subr.mxu0 0.0
        %508 = vmatpush1.msra.mxu0 0.0
        %509 = vmatprep.subr.mxu0 0.0
        %510 = vmatpush1.msra.mxu0 0.0
        %511 = vmatprep.subr.mxu0 0.0
        %512 = vmatpush1.msra.mxu0 0.0
        %513 = vmatprep.subr.mxu0 0.0
        %514 = vmatpush1.msra.mxu0 0.0
        %515 = vmatprep.subr.mxu0 0.0
        %516 = vmatpush1.msra.mxu0 0.0
        %517 = vmatprep.subr.mxu0 0.0
        %518 = vmatpush1.msra.mxu0 0.0
        %519 = vmatprep.subr.mxu0 0.0
        %520 = vmatpush1.msra.mxu0 0.0
        %521 = vmatprep.subr.mxu0 0.0
        %522 = vmatpush1.msra.mxu0 0.0
        %523 = vmatprep.subr.mxu0 0.0
        %524 = vmatpush1.msra.mxu0 0.0
        %525 = vmatprep.subr.mxu0 0.0
        %526 = vmatpush1.msra.mxu0 0.0
        %527 = vmatprep.subr.mxu0 0.0
        %528 = vmatpush1.msra.mxu0 0.0
        %529 = vmatprep.subr.mxu0 0.0
        %530 = vmatpush1.msra.mxu0 0.0
        %531 = vmatprep.subr.mxu0 0.0
        %532 = vmatpush1.msra.mxu0 0.0
        %533 = vmatprep.subr.mxu0 0.0
        %534 = vmatpush1.msra.mxu0 0.0
        %535 = vmatprep.subr.mxu0 0.0
        %536 = vmatpush1.msra.mxu0 0.0
        %537 = vmatprep.subr.mxu0 0.0
        %538 = vmatpush1.msra.mxu0 0.0
        %539 = vmatprep.subr.mxu0 0.0
        %540 = vmatpush1.msra.mxu0 0.0
        %541 = vmatprep.subr.mxu0 0.0
        %542 = vmatpush1.msra.mxu0 0.0
        %543 = vmatprep.subr.mxu0 0.0
        %544 = vmatpush1.msra.mxu0 0.0
        %545 = vmatprep.subr.mxu0 0.0
        %546 = vmatpush1.msra.mxu0 0.0
        %547 = vmatprep.subr.mxu0 0.0
        %548 = vmatpush1.msra.mxu0 0.0
        %549 = vmatprep.subr.mxu0 0.0
        %550 = vmatpush1.msra.mxu0 0.0
        %551 = vmatprep.mubr.f32.mxu0 0.0
        %552 = vmatmul.mubr.f32.gmra.mrb[0].mxu0 %v482
        %v553 = vpop.f32.mrb[0].mxu0
        %v554 = vadd.f32 0.0, %v553
        %v555 = vpop.f32.mrb[0].mxu0
        %556 = vmatprep.mubr.f32.mxu0 0.0
        %557 = vmatmul.mubr.f32.gmra.mrb[0].mxu0 %v485
        %v558 = vpop.f32.mrb[0].mxu0
        %v559 = vadd.f32 0.0, %v558
        %v560 = vpop.f32.mrb[0].mxu0
        %561 = vdwg.mxu0
        %vm564 = vcmask 1046528
        %v565 = vrot.slane %v554, 1
        %v566 = vrot.slane %v559, 1
        %v567 = vsel %vm564, %v565, %v566
        %568 = vrot.lane.b32.xlu0 %v567, 64
        %v569 = vpop.permute.xlu0 %568
        %vm571 = vcmask 1045504
        %v572 = vrot.slane %v554, 2
        %v573 = vrot.slane %v559, 2
        %v574 = vsel %vm571, %v572, %v573
        %vm575 = vcmask 523264
        %v576 = vsel %vm575, %v554, %v569
        %v577 = vld [vmem:[%s4] sm:$0xff]
        %v578 = vld [vmem:[%s4 + $0x8] sm:$0xff]
        %v579 = vld [vmem:[%s4 + $0x10] sm:$0xff]
        %v580 = vld [vmem:[%s4 + $0x18] sm:$0xff]
        %v581 = vld [vmem:[%s4 + $0x20] sm:$0xff]
        %v582 = vld [vmem:[%s4 + $0x28] sm:$0xff]
        %v583 = vld [vmem:[%s4 + $0x30] sm:$0xff]
        %v584 = vld [vmem:[%s4 + $0x38] sm:$0xff]
        %v585 = vld [vmem:[%s4 + $0x40] sm:$0xff]
        %v586 = vld [vmem:[%s4 + $0x48] sm:$0xff]
        %v587 = vld [vmem:[%s4 + $0x50] sm:$0xff]
        %v588 = vld [vmem:[%s4 + $0x58] sm:$0xff]
        %v589 = vld [vmem:[%s4 + $0x60] sm:$0xff]
        %v590 = vld [vmem:[%s4 + $0x68] sm:$0xff]
        %v591 = vld [vmem:[%s4 + $0x70] sm:$0xff]
        %v592 = vld [vmem:[%s4 + $0x78] sm:$0xff]
        %v593 = vld [vmem:[%s4 + $0x80] sm:$0xff]
        %v594 = vld [vmem:[%s4 + $0x88] sm:$0xff]
        %v595 = vld [vmem:[%s4 + $0x90] sm:$0xff]
        %v596 = vld [vmem:[%s4 + $0x98] sm:$0xff]
        %v597 = vld [vmem:[%s4 + $0xa0] sm:$0xff]
        %v598 = vld [vmem:[%s4 + $0xa8] sm:$0xff]
        %v599 = vld [vmem:[%s4 + $0xb0] sm:$0xff]
        %v600 = vld [vmem:[%s4 + $0xb8] sm:$0xff]
        %v601 = vld [vmem:[%s6] sm:$0x1]
        %v603 = vlaneseq
        %v604 = vshrl.u32 %v603, 7
        %v605 = vsub.s32 0, %v604
        %v606 = vrot.slane %v601, %v605
        %v608 = vsel %vm575, %v574, 0
        %610 = vmatprep.subr.mxu0 0.0
        %611 = vmatpush1.msra.mxu0 %v577
        %612 = vmatprep.subr.mxu0 0.0
        %613 = vmatpush1.msra.mxu0 %v578
        %614 = vmatprep.subr.mxu0 0.0
        %615 = vmatpush1.msra.mxu0 %v579
        %616 = vmatprep.subr.mxu0 0.0
        %617 = vmatpush1.msra.mxu0 %v580
        %618 = vmatprep.subr.mxu0 0.0
        %619 = vmatpush1.msra.mxu0 %v581
        %620 = vmatprep.subr.mxu0 0.0
        %621 = vmatpush1.msra.mxu0 %v582
        %622 = vmatprep.subr.mxu0 0.0
        %623 = vmatpush1.msra.mxu0 %v583
        %624 = vmatprep.subr.mxu0 0.0
        %625 = vmatpush1.msra.mxu0 %v584
        %626 = vmatprep.subr.mxu0 0.0
        %627 = vmatpush1.msra.mxu0 %v585
        %628 = vmatprep.subr.mxu0 0.0
        %629 = vmatpush1.msra.mxu0 %v586
        %630 = vmatprep.subr.mxu0 0.0
        %631 = vmatpush1.msra.mxu0 %v587
        %632 = vmatprep.subr.mxu0 0.0
        %633 = vmatpush1.msra.mxu0 %v588
        %634 = vmatprep.subr.mxu0 0.0
        %635 = vmatpush1.msra.mxu0 %v589
        %636 = vmatprep.subr.mxu0 0.0
        %637 = vmatpush1.msra.mxu0 %v590
        %638 = vmatprep.subr.mxu0 0.0
        %639 = vmatpush1.msra.mxu0 %v591
        %640 = vmatprep.subr.mxu0 0.0
        %641 = vmatpush1.msra.mxu0 %v592
        %642 = vmatprep.subr.mxu0 0.0
        %643 = vmatpush1.msra.mxu0 %v593
        %644 = vmatprep.subr.mxu0 0.0
        %645 = vmatpush1.msra.mxu0 %v594
        %646 = vmatprep.subr.mxu0 0.0
        %647 = vmatpush1.msra.mxu0 %v595
        %648 = vmatprep.subr.mxu0 0.0
        %649 = vmatpush1.msra.mxu0 %v596
        %650 = vmatprep.subr.mxu0 0.0
        %651 = vmatpush1.msra.mxu0 %v597
        %652 = vmatprep.subr.mxu0 0.0
        %653 = vmatpush1.msra.mxu0 %v598
        %654 = vmatprep.subr.mxu0 0.0
        %655 = vmatpush1.msra.mxu0 %v599
        %656 = vmatprep.subr.mxu0 0.0
        %657 = vmatpush1.msra.mxu0 %v600
        %658 = vmatprep.subr.mxu0 0.0
        %659 = vmatpush1.msra.mxu0 0.0
        %660 = vmatprep.subr.mxu0 0.0
        %661 = vmatpush1.msra.mxu0 0.0
        %662 = vmatprep.subr.mxu0 0.0
        %663 = vmatpush1.msra.mxu0 0.0
        %664 = vmatprep.subr.mxu0 0.0
        %665 = vmatpush1.msra.mxu0 0.0
        %666 = vmatprep.subr.mxu0 0.0
        %667 = vmatpush1.msra.mxu0 0.0
        %668 = vmatprep.subr.mxu0 0.0
        %669 = vmatpush1.msra.mxu0 0.0
        %670 = vmatprep.subr.mxu0 0.0
        %671 = vmatpush1.msra.mxu0 0.0
        %672 = vmatprep.subr.mxu0 0.0
        %673 = vmatpush1.msra.mxu0 0.0
        %674 = vmatprep.mubr.f32.mxu0 %v608
        %675 = vmatmul.mubr.f32.gmra.mrb[0].mxu0 %v576
        %v676 = vpop.f32.mrb[0].mxu0
        %v677 = vadd.f32 %v606, %v676
        %v678 = vpop.f32.mrb[0].mxu0
        %679 = vdwg.mxu0
        %v680 = vmax.f32 %v677, 0.0
        %v681 = vld [vmem:[%s8] sm:$0xff]
        %v682 = vld [vmem:[%s8 + $0x8] sm:$0xff]
        %vm683 = vcmask 64512
        %v685 = vsel %vm683, %v681, 0
        %v688 = vsel %vm683, %v682, 0
        %690 = vmatprep.subr.mxu0 0.0
        %691 = vmatpush1.msra.mxu0 %v680
        %692 = vmatprep.subr.mxu0 0.0
        %693 = vmatpush1.msra.mxu0 0.0
        %694 = vmatprep.subr.mxu0 0.0
        %695 = vmatpush1.msra.mxu0 0.0
        %696 = vmatprep.subr.mxu0 0.0
        %697 = vmatpush1.msra.mxu0 0.0
        %698 = vmatprep.subr.mxu0 0.0
        %699 = vmatpush1.msra.mxu0 0.0
        %700 = vmatprep.subr.mxu0 0.0
        %701 = vmatpush1.msra.mxu0 0.0
        %702 = vmatprep.subr.mxu0 0.0
        %703 = vmatpush1.msra.mxu0 0.0
        %704 = vmatprep.subr.mxu0 0.0
        %705 = vmatpush1.msra.mxu0 0.0
        %706 = vmatprep.subr.mxu0 0.0
        %707 = vmatpush1.msra.mxu0 0.0
        %708 = vmatprep.subr.mxu0 0.0
        %709 = vmatpush1.msra.mxu0 0.0
        %710 = vmatprep.subr.mxu0 0.0
        %711 = vmatpush1.msra.mxu0 0.0
        %712 = vmatprep.subr.mxu0 0.0
        %713 = vmatpush1.msra.mxu0 0.0
        %714 = vmatprep.subr.mxu0 0.0
        %715 = vmatpush1.msra.mxu0 0.0
        %716 = vmatprep.subr.mxu0 0.0
        %717 = vmatpush1.msra.mxu0 0.0
        %718 = vmatprep.subr.mxu0 0.0
        %719 = vmatpush1.msra.mxu0 0.0
        %720 = vmatprep.subr.mxu0 0.0
        %721 = vmatpush1.msra.mxu0 0.0
        %722 = vmatprep.subr.mxu0 0.0
        %723 = vmatpush1.msra.mxu0 0.0
        %724 = vmatprep.subr.mxu0 0.0
        %725 = vmatpush1.msra.mxu0 0.0
        %726 = vmatprep.subr.mxu0 0.0
        %727 = vmatpush1.msra.mxu0 0.0
        %728 = vmatprep.subr.mxu0 0.0
        %729 = vmatpush1.msra.mxu0 0.0
        %730 = vmatprep.subr.mxu0 0.0
        %731 = vmatpush1.msra.mxu0 0.0
        %732 = vmatprep.subr.mxu0 0.0
        %733 = vmatpush1.msra.mxu0 0.0
        %734 = vmatprep.subr.mxu0 0.0
        %735 = vmatpush1.msra.mxu0 0.0
        %736 = vmatprep.subr.mxu0 0.0
        %737 = vmatpush1.msra.mxu0 0.0
        %738 = vmatprep.subr.mxu0 0.0
        %739 = vmatpush1.msra.mxu0 0.0
        %740 = vmatprep.subr.mxu0 0.0
        %741 = vmatpush1.msra.mxu0 0.0
        %742 = vmatprep.subr.mxu0 0.0
        %743 = vmatpush1.msra.mxu0 0.0
        %744 = vmatprep.subr.mxu0 0.0
        %745 = vmatpush1.msra.mxu0 0.0
        %746 = vmatprep.subr.mxu0 0.0
        %747 = vmatpush1.msra.mxu0 0.0
        %748 = vmatprep.subr.mxu0 0.0
        %749 = vmatpush1.msra.mxu0 0.0
        %750 = vmatprep.subr.mxu0 0.0
        %751 = vmatpush1.msra.mxu0 0.0
        %752 = vmatprep.subr.mxu0 0.0
        %753 = vmatpush1.msra.mxu0 0.0
        %754 = vmatprep.mubr.f32.mxu0 0.0
        %755 = vmatmul.mubr.f32.gmra.mrb[0].mxu0 %v685
        %v756 = vpop.f32.mrb[0].mxu0
        %v757 = vadd.f32 0.0, %v756
        %v758 = vpop.f32.mrb[0].mxu0
        %759 = vmatprep.mubr.f32.mxu0 0.0
        %760 = vmatmul.mubr.f32.gmra.mrb[0].mxu0 %v688
        %v761 = vpop.f32.mrb[0].mxu0
        %v762 = vadd.f32 0.0, %v761
        %v763 = vpop.f32.mrb[0].mxu0
        %764 = vdwg.mxu0
        %v765 = vld [vmem:[%s3] sm:$0x3f]
        %768 = vrot.lane.b32.xlu0 %v470, 64
        %v769 = vpop.permute.xlu0 %768
        %770 = vrot.lane.b32.xlu0 %v475, 64
        %v771 = vpop.permute.xlu0 %770
        %v775 = vsel %vm480, %v765, 0
        %777 = vmatprep.subr.mxu0 0.0
        %778 = vmatpush1.msra.mxu0 %v769
        %779 = vmatprep.subr.mxu0 0.0
        %780 = vmatpush1.msra.mxu0 %v771
        %781 = vmatprep.subr.mxu0 0.0
        %782 = vmatpush1.msra.mxu0 0.0
        %783 = vmatprep.subr.mxu0 0.0
        %784 = vmatpush1.msra.mxu0 0.0
        %785 = vmatprep.subr.mxu0 0.0
        %786 = vmatpush1.msra.mxu0 0.0
        %787 = vmatprep.subr.mxu0 0.0
        %788 = vmatpush1.msra.mxu0 0.0
        %789 = vmatprep.subr.mxu0 0.0
        %790 = vmatpush1.msra.mxu0 0.0
        %791 = vmatprep.subr.mxu0 0.0
        %792 = vmatpush1.msra.mxu0 0.0
        %793 = vmatprep.subr.mxu0 0.0
        %794 = vmatpush1.msra.mxu0 0.0
        %795 = vmatprep.subr.mxu0 0.0
        %796 = vmatpush1.msra.mxu0 0.0
        %797 = vmatprep.subr.mxu0 0.0
        %798 = vmatpush1.msra.mxu0 0.0
        %799 = vmatprep.subr.mxu0 0.0
        %800 = vmatpush1.msra.mxu0 0.0
        %801 = vmatprep.subr.mxu0 0.0
        %802 = vmatpush1.msra.mxu0 0.0
        %803 = vmatprep.subr.mxu0 0.0
        %804 = vmatpush1.msra.mxu0 0.0
        %805 = vmatprep.subr.mxu0 0.0
        %806 = vmatpush1.msra.mxu0 0.0
        %807 = vmatprep.subr.mxu0 0.0
        %808 = vmatpush1.msra.mxu0 0.0
        %809 = vmatprep.subr.mxu0 0.0
        %810 = vmatpush1.msra.mxu0 0.0
        %811 = vmatprep.subr.mxu0 0.0
        %812 = vmatpush1.msra.mxu0 0.0
        %813 = vmatprep.subr.mxu0 0.0
        %814 = vmatpush1.msra.mxu0 0.0
        %815 = vmatprep.subr.mxu0 0.0
        %816 = vmatpush1.msra.mxu0 0.0
        %817 = vmatprep.subr.mxu0 0.0
        %818 = vmatpush1.msra.mxu0 0.0
        %819 = vmatprep.subr.mxu0 0.0
        %820 = vmatpush1.msra.mxu0 0.0
        %821 = vmatprep.subr.mxu0 0.0
        %822 = vmatpush1.msra.mxu0 0.0
        %823 = vmatprep.subr.mxu0 0.0
        %824 = vmatpush1.msra.mxu0 0.0
        %825 = vmatprep.subr.mxu0 0.0
        %826 = vmatpush1.msra.mxu0 0.0
        %827 = vmatprep.subr.mxu0 0.0
        %828 = vmatpush1.msra.mxu0 0.0
        %829 = vmatprep.subr.mxu0 0.0
        %830 = vmatpush1.msra.mxu0 0.0
        %831 = vmatprep.subr.mxu0 0.0
        %832 = vmatpush1.msra.mxu0 0.0
        %833 = vmatprep.subr.mxu0 0.0
        %834 = vmatpush1.msra.mxu0 0.0
        %835 = vmatprep.subr.mxu0 0.0
        %836 = vmatpush1.msra.mxu0 0.0
        %837 = vmatprep.subr.mxu0 0.0
        %838 = vmatpush1.msra.mxu0 0.0
        %839 = vmatprep.subr.mxu0 0.0
        %840 = vmatpush1.msra.mxu0 0.0
        %841 = vmatprep.mubr.f32.mxu0 0.0
        %842 = vmatmul.mubr.f32.gmra.mrb[0].mxu0 %v775
        %v843 = vpop.f32.mrb[0].mxu0
        %v844 = vadd.f32 0.0, %v843
        %v845 = vpop.f32.mrb[0].mxu0
        %846 = vdwg.mxu0
        %v848 = vrot.slane %v844, 1
        %849 = vrot.lane.b32.xlu0 %v848, 32
        %v850 = vpop.permute.xlu0 %849
        %v852 = vrot.slane %v844, 2
        %853 = vrot.lane.b32.xlu0 %v852, 64
        %v854 = vpop.permute.xlu0 %853
        %vm856 = vcmask 261120
        %v857 = vsel %vm856, %v844, %v850
        %v858 = vsel %vm575, %v857, %v854
        %v859 = vld [vmem:[%s5] sm:$0xff]
        %v860 = vld [vmem:[%s5 + $0x8] sm:$0xff]
        %v861 = vld [vmem:[%s5 + $0x10] sm:$0xff]
        %v862 = vld [vmem:[%s5 + $0x18] sm:$0xff]
        %v863 = vld [vmem:[%s5 + $0x20] sm:$0xff]
        %v864 = vld [vmem:[%s5 + $0x28] sm:$0xff]
        %v865 = vld [vmem:[%s5 + $0x30] sm:$0xff]
        %v866 = vld [vmem:[%s5 + $0x38] sm:$0xff]
        %v867 = vld [vmem:[%s5 + $0x40] sm:$0xff]
        %v868 = vld [vmem:[%s5 + $0x48] sm:$0xff]
        %v869 = vld [vmem:[%s5 + $0x50] sm:$0xff]
        %v870 = vld [vmem:[%s5 + $0x58] sm:$0xff]
        %v871 = vld [vmem:[%s7] sm:$0x1]
        %v873 = vlaneseq
        %v874 = vshrl.u32 %v873, 7
        %v875 = vsub.s32 0, %v874
        %v876 = vrot.slane %v871, %v875
        %vm878 = vcmask 785408
        %v880 = vsel %vm878, %v858, 0
        %882 = vmatprep.subr.mxu0 0.0
        %883 = vmatpush1.msra.mxu0 %v859
        %884 = vmatprep.subr.mxu0 0.0
        %885 = vmatpush1.msra.mxu0 %v860
        %886 = vmatprep.subr.mxu0 0.0
        %887 = vmatpush1.msra.mxu0 %v861
        %888 = vmatprep.subr.mxu0 0.0
        %889 = vmatpush1.msra.mxu0 %v862
        %890 = vmatprep.subr.mxu0 0.0
        %891 = vmatpush1.msra.mxu0 %v863
        %892 = vmatprep.subr.mxu0 0.0
        %893 = vmatpush1.msra.mxu0 %v864
        %894 = vmatprep.subr.mxu0 0.0
        %895 = vmatpush1.msra.mxu0 %v865
        %896 = vmatprep.subr.mxu0 0.0
        %897 = vmatpush1.msra.mxu0 %v866
        %898 = vmatprep.subr.mxu0 0.0
        %899 = vmatpush1.msra.mxu0 %v867
        %900 = vmatprep.subr.mxu0 0.0
        %901 = vmatpush1.msra.mxu0 %v868
        %902 = vmatprep.subr.mxu0 0.0
        %903 = vmatpush1.msra.mxu0 %v869
        %904 = vmatprep.subr.mxu0 0.0
        %905 = vmatpush1.msra.mxu0 %v870
        %906 = vmatprep.subr.mxu0 0.0
        %907 = vmatpush1.msra.mxu0 0.0
        %908 = vmatprep.subr.mxu0 0.0
        %909 = vmatpush1.msra.mxu0 0.0
        %910 = vmatprep.subr.mxu0 0.0
        %911 = vmatpush1.msra.mxu0 0.0
        %912 = vmatprep.subr.mxu0 0.0
        %913 = vmatpush1.msra.mxu0 0.0
        %914 = vmatprep.subr.mxu0 0.0
        %915 = vmatpush1.msra.mxu0 0.0
        %916 = vmatprep.subr.mxu0 0.0
        %917 = vmatpush1.msra.mxu0 0.0
        %918 = vmatprep.subr.mxu0 0.0
        %919 = vmatpush1.msra.mxu0 0.0
        %920 = vmatprep.subr.mxu0 0.0
        %921 = vmatpush1.msra.mxu0 0.0
        %922 = vmatprep.subr.mxu0 0.0
        %923 = vmatpush1.msra.mxu0 0.0
        %924 = vmatprep.subr.mxu0 0.0
        %925 = vmatpush1.msra.mxu0 0.0
        %926 = vmatprep.subr.mxu0 0.0
        %927 = vmatpush1.msra.mxu0 0.0
        %928 = vmatprep.subr.mxu0 0.0
        %929 = vmatpush1.msra.mxu0 0.0
        %930 = vmatprep.subr.mxu0 0.0
        %931 = vmatpush1.msra.mxu0 0.0
        %932 = vmatprep.subr.mxu0 0.0
        %933 = vmatpush1.msra.mxu0 0.0
        %934 = vmatprep.subr.mxu0 0.0
        %935 = vmatpush1.msra.mxu0 0.0
        %936 = vmatprep.subr.mxu0 0.0
        %937 = vmatpush1.msra.mxu0 0.0
        %938 = vmatprep.subr.mxu0 0.0
        %939 = vmatpush1.msra.mxu0 0.0
        %940 = vmatprep.subr.mxu0 0.0
        %941 = vmatpush1.msra.mxu0 0.0
        %942 = vmatprep.subr.mxu0 0.0
        %943 = vmatpush1.msra.mxu0 0.0
        %944 = vmatprep.subr.mxu0 0.0
        %945 = vmatpush1.msra.mxu0 0.0
        %946 = vmatprep.mubr.f32.mxu0 0.0
        %947 = vmatmul.mubr.f32.gmra.mrb[0].mxu0 %v880
        %v948 = vpop.f32.mrb[0].mxu0
        %v949 = vadd.f32 %v876, %v948
        %v950 = vpop.f32.mrb[0].mxu0
        %951 = vdwg.mxu0
        %v952 = vmax.f32 %v949, 0.0
        %v953 = vld [vmem:[%s9] sm:$0xff]
        %v954 = vld [vmem:[%s9 + $0x8] sm:$0xff]
        %vm955 = vcmask 31744
        %v957 = vsel %vm955, %v953, 0
        %v960 = vsel %vm955, %v954, 0
        %vm962 = vcmask 1043456
        %v964 = vsel %vm962, %v952, 0
        %966 = vmatprep.subr.mxu0 0.0
        %967 = vmatpush1.msra.mxu0 %v964
        %968 = vmatprep.subr.mxu0 0.0
        %969 = vmatpush1.msra.mxu0 0.0
        %970 = vmatprep.subr.mxu0 0.0
        %971 = vmatpush1.msra.mxu0 0.0
        %972 = vmatprep.subr.mxu0 0.0
        %973 = vmatpush1.msra.mxu0 0.0
        %974 = vmatprep.subr.mxu0 0.0
        %975 = vmatpush1.msra.mxu0 0.0
        %976 = vmatprep.subr.mxu0 0.0
        %977 = vmatpush1.msra.mxu0 0.0
        %978 = vmatprep.subr.mxu0 0.0
        %979 = vmatpush1.msra.mxu0 0.0
        %980 = vmatprep.subr.mxu0 0.0
        %981 = vmatpush1.msra.mxu0 0.0
        %982 = vmatprep.subr.mxu0 0.0
        %983 = vmatpush1.msra.mxu0 0.0
        %984 = vmatprep.subr.mxu0 0.0
        %985 = vmatpush1.msra.mxu0 0.0
        %986 = vmatprep.subr.mxu0 0.0
        %987 = vmatpush1.msra.mxu0 0.0
        %988 = vmatprep.subr.mxu0 0.0
        %989 = vmatpush1.msra.mxu0 0.0
        %990 = vmatprep.subr.mxu0 0.0
        %991 = vmatpush1.msra.mxu0 0.0
        %992 = vmatprep.subr.mxu0 0.0
        %993 = vmatpush1.msra.mxu0 0.0
        %994 = vmatprep.subr.mxu0 0.0
        %995 = vmatpush1.msra.mxu0 0.0
        %996 = vmatprep.subr.mxu0 0.0
        %997 = vmatpush1.msra.mxu0 0.0
        %998 = vmatprep.subr.mxu0 0.0
        %999 = vmatpush1.msra.mxu0 0.0
        %1000 = vmatprep.subr.mxu0 0.0
        %1001 = vmatpush1.msra.mxu0 0.0
        %1002 = vmatprep.subr.mxu0 0.0
        %1003 = vmatpush1.msra.mxu0 0.0
        %1004 = vmatprep.subr.mxu0 0.0
        %1005 = vmatpush1.msra.mxu0 0.0
        %1006 = vmatprep.subr.mxu0 0.0
        %1007 = vmatpush1.msra.mxu0 0.0
        %1008 = vmatprep.subr.mxu0 0.0
        %1009 = vmatpush1.msra.mxu0 0.0
        %1010 = vmatprep.subr.mxu0 0.0
        %1011 = vmatpush1.msra.mxu0 0.0
        %1012 = vmatprep.subr.mxu0 0.0
        %1013 = vmatpush1.msra.mxu0 0.0
        %1014 = vmatprep.subr.mxu0 0.0
        %1015 = vmatpush1.msra.mxu0 0.0
        %1016 = vmatprep.subr.mxu0 0.0
        %1017 = vmatpush1.msra.mxu0 0.0
        %1018 = vmatprep.subr.mxu0 0.0
        %1019 = vmatpush1.msra.mxu0 0.0
        %1020 = vmatprep.subr.mxu0 0.0
        %1021 = vmatpush1.msra.mxu0 0.0
        %1022 = vmatprep.subr.mxu0 0.0
        %1023 = vmatpush1.msra.mxu0 0.0
        %1024 = vmatprep.subr.mxu0 0.0
        %1025 = vmatpush1.msra.mxu0 0.0
        %1026 = vmatprep.subr.mxu0 0.0
        %1027 = vmatpush1.msra.mxu0 0.0
        %1028 = vmatprep.subr.mxu0 0.0
        %1029 = vmatpush1.msra.mxu0 0.0
        %1030 = vmatprep.mubr.f32.mxu0 0.0
        %1031 = vmatmul.mubr.f32.gmra.mrb[0].mxu0 %v957
        %v1032 = vpop.f32.mrb[0].mxu0
        %v1033 = vadd.f32 0.0, %v1032
        %v1034 = vpop.f32.mrb[0].mxu0
        %1035 = vmatprep.mubr.f32.mxu0 0.0
        %1036 = vmatmul.mubr.f32.gmra.mrb[0].mxu0 %v960
        %v1037 = vpop.f32.mrb[0].mxu0
        %v1038 = vadd.f32 0.0, %v1037
        %v1039 = vpop.f32.mrb[0].mxu0
        %1040 = vdwg.mxu0
        %1043 = vrot.lane.b32.xlu0 %v1033, 64
        %v1044 = vpop.permute.xlu0 %1043
        %1045 = vrot.lane.b32.xlu0 %v1038, 64
        %v1046 = vpop.permute.xlu0 %1045
        %v1049 = vsel %vm575, %v757, %v1044
        %v1050 = vsel %vm575, %v762, %v1046
        %v1051 = vld [vmem:[%s10] sm:$0xff]
        %v1052 = vld [vmem:[%s10 + $0x8] sm:$0xff]
        %v1053 = vld [vmem:[%s10 + $0x10] sm:$0xff]
        %v1054 = vld [vmem:[%s10 + $0x18] sm:$0xff]
        %v1055 = vld [vmem:[%s10 + $0x20] sm:$0xff]
        %v1056 = vld [vmem:[%s10 + $0x28] sm:$0xff]
        %v1057 = vld [vmem:[%s10 + $0x30] sm:$0xff]
        %v1058 = vld [vmem:[%s10 + $0x38] sm:$0xff]
        %v1059 = vld [vmem:[%s10 + $0x40] sm:$0xff]
        %v1060 = vld [vmem:[%s10 + $0x48] sm:$0xff]
        %v1061 = vld [vmem:[%s10 + $0x50] sm:$0xff]
        %v1062 = vld [vmem:[%s10 + $0x58] sm:$0xff]
        %v1064 = vsel %vm878, %v1049, 0
        %v1067 = vsel %vm878, %v1050, 0
        %1069 = vmatprep.subr.mxu0 0.0
        %1070 = vmatpush1.msra.mxu0 %v1051
        %1071 = vmatprep.subr.mxu0 0.0
        %1072 = vmatpush1.msra.mxu0 %v1052
        %1073 = vmatprep.subr.mxu0 0.0
        %1074 = vmatpush1.msra.mxu0 %v1053
        %1075 = vmatprep.subr.mxu0 0.0
        %1076 = vmatpush1.msra.mxu0 %v1054
        %1077 = vmatprep.subr.mxu0 0.0
        %1078 = vmatpush1.msra.mxu0 %v1055
        %1079 = vmatprep.subr.mxu0 0.0
        %1080 = vmatpush1.msra.mxu0 %v1056
        %1081 = vmatprep.subr.mxu0 0.0
        %1082 = vmatpush1.msra.mxu0 %v1057
        %1083 = vmatprep.subr.mxu0 0.0
        %1084 = vmatpush1.msra.mxu0 %v1058
        %1085 = vmatprep.subr.mxu0 0.0
        %1086 = vmatpush1.msra.mxu0 %v1059
        %1087 = vmatprep.subr.mxu0 0.0
        %1088 = vmatpush1.msra.mxu0 %v1060
        %1089 = vmatprep.subr.mxu0 0.0
        %1090 = vmatpush1.msra.mxu0 %v1061
        %1091 = vmatprep.subr.mxu0 0.0
        %1092 = vmatpush1.msra.mxu0 %v1062
        %1093 = vmatprep.subr.mxu0 0.0
        %1094 = vmatpush1.msra.mxu0 0.0
        %1095 = vmatprep.subr.mxu0 0.0
        %1096 = vmatpush1.msra.mxu0 0.0
        %1097 = vmatprep.subr.mxu0 0.0
        %1098 = vmatpush1.msra.mxu0 0.0
        %1099 = vmatprep.subr.mxu0 0.0
        %1100 = vmatpush1.msra.mxu0 0.0
        %1101 = vmatprep.subr.mxu0 0.0
        %1102 = vmatpush1.msra.mxu0 0.0
        %1103 = vmatprep.subr.mxu0 0.0
        %1104 = vmatpush1.msra.mxu0 0.0
        %1105 = vmatprep.subr.mxu0 0.0
        %1106 = vmatpush1.msra.mxu0 0.0
        %1107 = vmatprep.subr.mxu0 0.0
        %1108 = vmatpush1.msra.mxu0 0.0
        %1109 = vmatprep.subr.mxu0 0.0
        %1110 = vmatpush1.msra.mxu0 0.0
        %1111 = vmatprep.subr.mxu0 0.0
        %1112 = vmatpush1.msra.mxu0 0.0
        %1113 = vmatprep.subr.mxu0 0.0
        %1114 = vmatpush1.msra.mxu0 0.0
        %1115 = vmatprep.subr.mxu0 0.0
        %1116 = vmatpush1.msra.mxu0 0.0
        %1117 = vmatprep.subr.mxu0 0.0
        %1118 = vmatpush1.msra.mxu0 0.0
        %1119 = vmatprep.subr.mxu0 0.0
        %1120 = vmatpush1.msra.mxu0 0.0
        %1121 = vmatprep.subr.mxu0 0.0
        %1122 = vmatpush1.msra.mxu0 0.0
        %1123 = vmatprep.subr.mxu0 0.0
        %1124 = vmatpush1.msra.mxu0 0.0
        %1125 = vmatprep.subr.mxu0 0.0
        %1126 = vmatpush1.msra.mxu0 0.0
        %1127 = vmatprep.subr.mxu0 0.0
        %1128 = vmatpush1.msra.mxu0 0.0
        %1129 = vmatprep.subr.mxu0 0.0
        %1130 = vmatpush1.msra.mxu0 0.0
        %1131 = vmatprep.subr.mxu0 0.0
        %1132 = vmatpush1.msra.mxu0 0.0
        %1133 = vmatprep.mubr.f32.mxu0 0.0
        %1134 = vmatmul.mubr.f32.gmra.mrb[0].mxu0 %v1064
        %v1135 = vpop.f32.mrb[0].mxu0
        %v1136 = vadd.f32 0.0, %v1135
        %v1137 = vpop.f32.mrb[0].mxu0
        %1138 = vmatprep.mubr.f32.mxu0 0.0
        %1139 = vmatmul.mubr.f32.gmra.mrb[0].mxu0 %v1067
        %v1140 = vpop.f32.mrb[0].mxu0
        %v1141 = vadd.f32 0.0, %v1140
        %v1142 = vpop.f32.mrb[0].mxu0
        %1143 = vdwg.mxu0
        %v1144 = vadd.f32 %v385, %v1136
        %v1145 = vadd.f32 %v386, %v1141
        %1146 = vst [vmem:[%s379] sm:$0xff] %v1144
        %1147 = vst [vmem:[%s379 + $0x8] sm:$0xff] %v1145
        %s1148 = sand.u32 %s269, 1
        %s1149 = scalar_lea.sflag [#allocation3], %s1148
        %s1150 = sand.u32 %s269, 1
        %s1151 = smul.addr %s1150, 16
        %s1152 = scalar_lea.vmem [#allocation2], %s1151
        // Predicated region
        $region65: #{tpu_custom_call.1} parent=63 // pred_check
          %p1153 = pneg %p279
        $region66: #{tpu_custom_call.1} parent=63 // pred_check_branch
          %1155 = sbr.rel (%p1153) target = $region68
        $region67: #{tpu_custom_call.1} parent=63 // pred_region
          %s1157 = ssub.s32 256, 256
          %1158 = vsyncadd %s1149, %s1157
          %s1159 = smul.addr %s25, 2
          %s1160 = smul.addr %s1159, 128
          %s1161 = scalar_lea.hbm %s11, %s1160
          %s1162 = sshll.u32 %s1152, 4
          %s1163 = int_to_ptr.vmem [resolvable:$true] %s1162
          %1168 = dma.vmem_to_hbm [thread:$0]  %s1163, 256, %s1161, %s1149, 128, 128, 8
        $region68: #{tpu_custom_call.1} parent=63 // pred_fallthru
          _
      $region64: #{tpu_custom_call.1} parent=5 // pred_fallthru
        _
      %p1169 = scmp.le.s32.totalorder 2, %s20
      // Predicated region
      $region69: #{tpu_custom_call.1} parent=5 // pred_check
        %p1170 = pneg %p1169
      $region70: #{tpu_custom_call.1} parent=5 // pred_check_branch
        %1172 = sbr.rel (%p1170) target = $region72
      $region71: #{tpu_custom_call.1} parent=5 // pred_region
        %s1173 = ssub.s32 %s20, 2
        // Predicated region
        $region73: #{tpu_custom_call.1} parent=71 // pred_check
          %p1174 = pneg %p285
        $region74: #{tpu_custom_call.1} parent=71 // pred_check_branch
          %1176 = sbr.rel (%p1174) target = $region76
        $region75: #{tpu_custom_call.1} parent=71 // pred_region
          %s1177 = sand.u32 %s270, 1
          %s1178 = scalar_lea.sflag [#allocation3], %s1177
          %s1179 = sand.u32 %s270, 1
          %s1180 = smul.addr %s1179, 16
          %s1181 = scalar_lea.vmem [#allocation2], %s1180
          %1182 = dma.done %s1178, 256
        $region76: #{tpu_custom_call.1} parent=71 // pred_fallthru
          _
      $region72: #{tpu_custom_call.1} parent=5 // pred_fallthru
        _
    $region6: #{tpu_custom_call.1} parent=1 // loop_footer
      %s24 = sadd.s32 1, %s20
    $region7: #{tpu_custom_call.1} parent=1 // loop_footer_branch
      %19 = sbr.rel target = $region3
    $region8: #{tpu_custom_call.1} parent=1 // loop_exit
      _
    %1183 = vsyncpa [#allocation3], 1
    %s1184 = scalar_lea.sflag [#allocation3], 1
    %1185 = vsyncpa %s1184, 1

</llo_original>
